<compile_context>
chip_gen: v6e
topology: v6e:2x2x1
jax: 0.10.0
libtpu: 0.0.40
codegen_flags: <defaults>
</compile_context>

<pallas_src>
import jax
import jax.numpy as jnp
from jax import lax
from jax.experimental import pallas as pl
from jax.experimental.pallas import tpu as pltpu


# ----------------------------------------------------------------------------
# Kernel
# ----------------------------------------------------------------------------
def _make_combine_loc_kernel(mid: int):
    """Kernel factory; `mid` = h_g // 2 (static Python int).

    Packed-parameter row layout, one (R, H) f32 tile with H = 2*mid:
      rows 0:2            [W1f | 0 ]   (2, H)  block-diag stage-1 weights
      rows 2:4            [ 0 | W2f]   (2, H)
      row  4              [b1f | b2f]
      row  5              b3f
      row  6              [b4_0, b4_1, 0, ...]
      rows 8:8+mid        W3f   (mid, H)   (in -> out layout, BN folded)
      rows 8+mid:10+mid   W4    (2,  H)    (PyTorch (out, in) layout)
      remaining rows      zero padding (R rounded up to a multiple of 8)
    """
    H = 2 * mid
    W3_ROW = 8
    W4_ROW = 8 + mid

    def kernel(bu_ref, td_ref, p_ref, out_ref):
        bu = bu_ref[...]                     # (Bt, 2)
        td = td_ref[...]                     # (Bt, 2)

        # --- stage 1: BN_bu(fc1(l_bu)) and BN_td(fc2(l_td)), fused as two
        #     tiny MXU dots against the block-diagonal packed weights.
        z12 = (jnp.dot(bu, p_ref[0:2, :], preferred_element_type=jnp.float32)
               + jnp.dot(td, p_ref[2:4, :], preferred_element_type=jnp.float32)
               + p_ref[4:5, :])              # (Bt, H) = [z_bu | z_td]
        h12 = jnp.maximum(z12, 0.0)          # (Bt, H) = [l_bu_fc | l_td_fc]

        # elementwise combination of the two halves
        prod = h12[:, 0:mid] * h12[:, mid:H]                  # (Bt, mid)

        # --- stage 2: BN_c(fc3(prod)) as one MXU dot, then ReLU.
        z3 = jnp.dot(prod, p_ref[W3_ROW:W3_ROW + mid, :],
                     preferred_element_type=jnp.float32) + p_ref[5:6, :]
        h3 = jnp.maximum(z3, 0.0)                             # (Bt, H)

        # --- stage 3: fc4 (H -> 2) as one dot_general contracting H
        #     (W4 stays in PyTorch (out, in) layout => rhs-transposed matmul).
        w4 = p_ref[W4_ROW:W4_ROW + 2, :]                      # (2, H)
        o = lax.dot_general(h3, w4, (((1,), (1,)), ((), ())),
                            preferred_element_type=jnp.float32)  # (Bt, 2)
        out_ref[...] = jnp.tanh(o + p_ref[6:7, 0:2])

    return kernel


# ----------------------------------------------------------------------------
# Wrapper-side parameter folding / packing (one-time, outside the hot path)
# ----------------------------------------------------------------------------
def fold_bn_into_linear(w, b, gamma, beta, mean, var, eps=1e-5):
    """Fold eval-mode BatchNorm1d into a preceding nn.Linear.

    w: (out, in) PyTorch layout.  Returns (in, out) weight and (out,) bias so
    the kernel computes y = x @ Wf + bf.
    """
    s = gamma / jnp.sqrt(var + eps)
    wf = (w * s[:, None]).T                  # (in, out)
    bf = b * s + beta - mean * s             # (out,)
    return wf.astype(jnp.float32), bf.astype(jnp.float32)


def pack_params(mid, w1f, b1f, w2f, b2f, w3f, b3f, w4, b4):
    """Pack all (BN-folded) parameters into a single (R, 2*mid) f32 tile."""
    H = 2 * mid
    R = ((8 + mid + 2) + 7) // 8 * 8         # rows, padded to a multiple of 8
    P = jnp.zeros((R, H), jnp.float32)
    P = P.at[0:2, 0:mid].set(w1f)            # (2, mid)
    P = P.at[2:4, mid:H].set(w2f)            # (2, mid)
    P = P.at[4, 0:mid].set(b1f)
    P = P.at[4, mid:H].set(b2f)
    P = P.at[5, :].set(b3f)
    P = P.at[6, 0:2].set(b4)
    P = P.at[8:8 + mid, :].set(w3f)          # (mid, H)
    P = P.at[8 + mid:10 + mid, :].set(w4)    # (2, H), PyTorch (out, in) layout
    return P


def _choose_row_tile(B: int) -> int:
    """Pick a row tile: large (amortizes the ~0.35us/step overhead) and a
    multiple of 8 when the batch axis is grid-tiled; fall back to a single
    block for tiny / odd batches."""
    for t in (4096, 2048, 1024, 512, 256, 128, 64, 32, 16, 8):
        if B % t == 0:
            return t
    return B


# ----------------------------------------------------------------------------
# pallas_call wrapper
# ----------------------------------------------------------------------------
def combine_location_network_forward(l_t_bu, l_t_td, packed_params, mid):
    """l_t_bu, l_t_td: (B, 2) f32.  Returns l_out: (B, 2) f32.

    For per-timestep recurrences, batch T timesteps along the row axis
    (inputs become (T*B, 2)); the grid tiles that axis and, with "parallel"
    semantics, shards it across v7x's two TensorCores.
    """
    B = l_t_bu.shape[0]
    H = 2 * mid
    R, C = packed_params.shape
    assert C == H and H <= 128, "packed layout assumes h_g <= 128 lanes"

    l_t_bu = l_t_bu.astype(jnp.float32)
    l_t_td = l_t_td.astype(jnp.float32)

    bt = _choose_row_tile(B)
    grid = (B // bt,)

    kernel = _make_combine_loc_kernel(mid)

    # Advisory cost hint so XLA can overlap this tiny latency-bound call.
    flops = 2 * B * (2 * H + 2 * H + mid * H + H * 2)
    bytes_accessed = 4 * (B * 2 * 2 + R * C + B * 2)
    cost = pl.CostEstimate(flops=flops, transcendentals=2 * B,
                           bytes_accessed=bytes_accessed)

    out = pl.pallas_call(
        kernel,
        grid=grid,
        in_specs=[
            pl.BlockSpec((bt, 2), lambda i: (i, 0)),   # l_t_bu row tile
            pl.BlockSpec((bt, 2), lambda i: (i, 0)),   # l_t_td row tile
            pl.BlockSpec((R, C), lambda i: (0, 0)),    # packed params (resident)
        ],
        out_specs=pl.BlockSpec((bt, 2), lambda i: (i, 0)),
        out_shape=jax.ShapeDtypeStruct((B, 2), jnp.float32),
        compiler_params=pltpu.CompilerParams(
            dimension_semantics=("parallel",)),
        cost_estimate=cost,
    )(l_t_bu, l_t_td, packed_params)
    return out


# ----------------------------------------------------------------------------
# Demo + correctness check
# ----------------------------------------------------------------------------
if __name__ == "__main__":
    h_g = 32                 # hidden size
    mid = h_g // 2           # 16
    D_in = 2
    B = 2
    eps = 1e-5

    key = jax.random.PRNGKey(0)
    ks = jax.random.split(key, 24)

    def uinit(k, shape, fan_in):
        bound = 1.0 / jnp.sqrt(jnp.float32(fan_in))
        return jax.random.uniform(k, shape, jnp.float32, -bound, bound)

    # Linear params (PyTorch (out, in) layout)
    W1 = uinit(ks[0], (mid, D_in), D_in); b1 = uinit(ks[1], (mid,), D_in)
    W2 = uinit(ks[2], (mid, D_in), D_in); b2 = uinit(ks[3], (mid,), D_in)
    W3 = uinit(ks[4], (h_g, mid), mid);   b3 = uinit(ks[5], (h_g,), mid)
    W4 = uinit(ks[6], (D_in, h_g), h_g);  b4 = uinit(ks[7], (D_in,), h_g)

    # BatchNorm (eval-mode) params / running stats
    def bn_params(k0, k1, k2, k3, n):
        gamma = jax.random.uniform(k0, (n,), jnp.float32, 0.5, 1.5)
        beta = 0.1 * jax.random.normal(k1, (n,), jnp.float32)
        mean = 0.1 * jax.random.normal(k2, (n,), jnp.float32)
        var = jax.random.uniform(k3, (n,), jnp.float32, 0.5, 1.5)
        return gamma, beta, mean, var

    g_bu, be_bu, m_bu, v_bu = bn_params(ks[8], ks[9], ks[10], ks[11], mid)
    g_td, be_td, m_td, v_td = bn_params(ks[12], ks[13], ks[14], ks[15], mid)
    g_c, be_c, m_c, v_c = bn_params(ks[16], ks[17], ks[18], ks[19], h_g)

    # Inputs: glimpse coordinates in [-1, 1]
    l_t_bu = jnp.tanh(jax.random.normal(ks[20], (B, D_in), jnp.float32))
    l_t_td = jnp.tanh(jax.random.normal(ks[21], (B, D_in), jnp.float32))

    # Fold BN into the Linears and pack everything into one tile.
    w1f, b1f = fold_bn_into_linear(W1, b1, g_bu, be_bu, m_bu, v_bu, eps)
    w2f, b2f = fold_bn_into_linear(W2, b2, g_td, be_td, m_td, v_td, eps)
    w3f, b3f = fold_bn_into_linear(W3, b3, g_c, be_c, m_c, v_c, eps)
    P = pack_params(mid, w1f, b1f, w2f, b2f, w3f, b3f, W4, b4)

    l_out = combine_location_network_forward(l_t_bu, l_t_td, P, mid)
    jax.block_until_ready(l_out)

    # Pure-JAX reference of the unfolded module (eval-mode BN), full f32.
    def linear(x, w, b):
        return jnp.dot(x, w.T, precision=jax.lax.Precision.HIGHEST) + b

    def bn(x, g, be, m, v):
        return g * (x - m) / jnp.sqrt(v + eps) + be

    h_bu = jnp.maximum(bn(linear(l_t_bu, W1, b1), g_bu, be_bu, m_bu, v_bu), 0.0)
    h_td = jnp.maximum(bn(linear(l_t_td, W2, b2), g_td, be_td, m_td, v_td), 0.0)
    h_c = jnp.maximum(bn(linear(h_bu * h_td, W3, b3), g_c, be_c, m_c, v_c), 0.0)
    ref = jnp.tanh(linear(h_c, W4, b4))

    assert l_out.shape == (B, D_in)
    assert jnp.allclose(l_out, ref, atol=1e-4, rtol=1e-4), "l_out mismatch"

    print("KERNEL_OK")
</pallas_src>

<mosaic_0001>
module attributes {stable_mosaic.version = 11 : i64} {
  func.func @kernel(%arg0: i32, %arg1: memref<2x2xf32, #tpu.memory_space<vmem>>, %arg2: memref<2x2xf32, #tpu.memory_space<vmem>>, %arg3: memref<32x32xf32, #tpu.memory_space<vmem>>, %arg4: memref<2x2xf32, #tpu.memory_space<vmem>>) attributes {dimension_semantics = [#tpu.dimension_semantics<parallel>], iteration_bounds = array<i64: 1>, scalar_prefetch = 0 : i64, scratch_operands = 0 : i64, tpu.core_type = #tpu.core_type<tc>, window_params = [{transform_indices = @transform_0, window_bounds = array<i64: 2, 2>}, {transform_indices = @transform_1, window_bounds = array<i64: 2, 2>}, {pipeline_mode = #tpu.pipeline_mode<synchronous>, transform_indices = @transform_2, window_bounds = array<i64: 32, 32>}, {transform_indices = @transform_3, window_bounds = array<i64: 2, 2>}]} {
    %c0 = arith.constant 0 : index
    %c0_0 = arith.constant 0 : index
    %0 = vector.load %arg1[%c0, %c0_0] : memref<2x2xf32, #tpu.memory_space<vmem>>, vector<2x2xf32>
    %c0_1 = arith.constant 0 : index
    %c0_2 = arith.constant 0 : index
    %1 = vector.load %arg2[%c0_1, %c0_2] : memref<2x2xf32, #tpu.memory_space<vmem>>, vector<2x2xf32>
    %c0_3 = arith.constant 0 : index
    %c0_4 = arith.constant 0 : index
    %2 = vector.load %arg3[%c0_3, %c0_4] : memref<32x32xf32, #tpu.memory_space<vmem>>, vector<2x32xf32>
    %cst = arith.constant dense<0.000000e+00> : vector<2x32xf32>
    %3 = tpu.matmul %0, %2, %cst {dimension_numbers = #tpu.dot_dimension_numbers<[1], [0], [0], [1], [0, 0, 1, 1], [], []>} : vector<2x2xf32>, vector<2x32xf32>, vector<2x32xf32> -> vector<2x32xf32>
    %c2 = arith.constant 2 : index
    %c0_5 = arith.constant 0 : index
    %4 = vector.load %arg3[%c2, %c0_5] : memref<32x32xf32, #tpu.memory_space<vmem>>, vector<2x32xf32>
    %cst_6 = arith.constant dense<0.000000e+00> : vector<2x32xf32>
    %5 = tpu.matmul %1, %4, %cst_6 {dimension_numbers = #tpu.dot_dimension_numbers<[1], [0], [0], [1], [0, 0, 1, 1], [], []>} : vector<2x2xf32>, vector<2x32xf32>, vector<2x32xf32> -> vector<2x32xf32>
    %6 = arith.addf %3, %5 : vector<2x32xf32>
    %c4 = arith.constant 4 : index
    %c0_7 = arith.constant 0 : index
    %7 = vector.load %arg3[%c4, %c0_7] : memref<32x32xf32, #tpu.memory_space<vmem>>, vector<1x32xf32>
    %8 = vector.broadcast %7 : vector<1x32xf32> to vector<2x32xf32>
    %9 = arith.addf %6, %8 : vector<2x32xf32>
    %cst_8 = arith.constant 0.000000e+00 : f32
    %10 = vector.broadcast %cst_8 : f32 to vector<2x32xf32>
    %11 = arith.maximumf %9, %10 : vector<2x32xf32>
    %12 = vector.extract_strided_slice %11 {offsets = [0, 0], sizes = [2, 16], strides = [1, 1]} : vector<2x32xf32> to vector<2x16xf32>
    %13 = vector.extract_strided_slice %11 {offsets = [0, 16], sizes = [2, 16], strides = [1, 1]} : vector<2x32xf32> to vector<2x16xf32>
    %14 = arith.mulf %12, %13 : vector<2x16xf32>
    %c8 = arith.constant 8 : index
    %c0_9 = arith.constant 0 : index
    %15 = vector.load %arg3[%c8, %c0_9] : memref<32x32xf32, #tpu.memory_space<vmem>>, vector<16x32xf32>
    %cst_10 = arith.constant dense<0.000000e+00> : vector<2x32xf32>
    %16 = tpu.matmul %14, %15, %cst_10 {dimension_numbers = #tpu.dot_dimension_numbers<[1], [0], [0], [1], [0, 0, 1, 1], [], []>} : vector<2x16xf32>, vector<16x32xf32>, vector<2x32xf32> -> vector<2x32xf32>
    %c5 = arith.constant 5 : index
    %c0_11 = arith.constant 0 : index
    %17 = vector.load %arg3[%c5, %c0_11] : memref<32x32xf32, #tpu.memory_space<vmem>>, vector<1x32xf32>
    %18 = vector.broadcast %17 : vector<1x32xf32> to vector<2x32xf32>
    %19 = arith.addf %16, %18 : vector<2x32xf32>
    %cst_12 = arith.constant 0.000000e+00 : f32
    %20 = vector.broadcast %cst_12 : f32 to vector<2x32xf32>
    %21 = arith.maximumf %19, %20 : vector<2x32xf32>
    %c24 = arith.constant 24 : index
    %c0_13 = arith.constant 0 : index
    %22 = vector.load %arg3[%c24, %c0_13] : memref<32x32xf32, #tpu.memory_space<vmem>>, vector<2x32xf32>
    %cst_14 = arith.constant dense<0.000000e+00> : vector<2x2xf32>
    %23 = tpu.matmul %21, %22, %cst_14 {dimension_numbers = #tpu.dot_dimension_numbers<[1], [1], [0], [0], [0, 0, 1, 0], [], []>} : vector<2x32xf32>, vector<2x32xf32>, vector<2x2xf32> -> vector<2x2xf32>
    %c6 = arith.constant 6 : index
    %c0_15 = arith.constant 0 : index
    %24 = vector.load %arg3[%c6, %c0_15] : memref<32x32xf32, #tpu.memory_space<vmem>>, vector<1x2xf32>
    %25 = vector.broadcast %24 : vector<1x2xf32> to vector<2x2xf32>
    %26 = arith.addf %23, %25 : vector<2x2xf32>
    %27 = math.tanh %26 : vector<2x2xf32>
    %c0_16 = arith.constant 0 : index
    %c0_17 = arith.constant 0 : index
    %28 = vector.load %arg4[%c0_16, %c0_17] : memref<2x2xf32, #tpu.memory_space<vmem>>, vector<2x2xf32>
    tpu.vector_store %arg4[%c0_16, %c0_17], %27 {strides = array<i32>} : memref<2x2xf32, #tpu.memory_space<vmem>>, vector<2x2xf32>,
    return
  }
  func.func @transform_0(%arg0: i32) -> (i32, i32) {
    %c0_i32 = arith.constant 0 : i32
    %c0_i32_0 = arith.constant 0 : i32
    return %arg0, %c0_i32 : i32, i32
  }
  func.func @transform_1(%arg0: i32) -> (i32, i32) {
    %c0_i32 = arith.constant 0 : i32
    %c0_i32_0 = arith.constant 0 : i32
    return %arg0, %c0_i32 : i32, i32
  }
  func.func @transform_2(%arg0: i32) -> (i32, i32) {
    %c0_i32 = arith.constant 0 : i32
    %c0_i32_0 = arith.constant 0 : i32
    %c0_i32_1 = arith.constant 0 : i32
    return %c0_i32, %c0_i32_0 : i32, i32
  }
  func.func @transform_3(%arg0: i32) -> (i32, i32) {
    %c0_i32 = arith.constant 0 : i32
    %c0_i32_0 = arith.constant 0 : i32
    return %arg0, %c0_i32 : i32, i32
  }
}

</mosaic_0001>

<llo_original>
// kernel: tpu_custom_call.1
$region0: #{tpu_custom_call.1}
  #allocation0 [shape = 'u32[]', space=smem, size = 0x4, offset = 0x4, fixed_abs, tag = 'smem constant byte address 0x4 - core index']
  #allocation1 [shape = 'u32[144,128]{1,0:T(1,128)}', space=vmem, size = 0x12000, scoped, tag = 'internal scratch']
  %s0 = inlined_call_operand.hbm [shape: f32[2,2], index: 0, kind: input, shape index: {}]
  %s1 = inlined_call_operand.hbm [shape: f32[2,2], index: 1, kind: input, shape index: {}]
  %s2 = inlined_call_operand.hbm [shape: f32[32,32], index: 2, kind: input, shape index: {}]
  %s3 = inlined_call_operand.hbm [shape: f32[2,2], index: 3, kind: output, shape index: {}]
  %s4 = sld [smem:[#allocation0]]
  $region34: #{tpu_custom_call.1} parent=0
    _
  %s6 = ssub.s32 1, %s4
  %s7 = scalar_select 0, %s6, %s4
  $region1: #{tpu_custom_call.1} parent=0
    #allocation2 [shape = 'u8[1024]{0}', space=vmem, size = 0x400, scoped, tag = 'input window, operand 0, single buffered']
    #allocation3 [shape = 's32[1]{0}', space=sflag, size = 0x4, scoped, tag = 'scoped memory for tpu_custom_call.1']
    #allocation4 [shape = 's32[1]{0}', space=sflag, size = 0x4, scoped, tag = 'scoped memory for tpu_custom_call.1']
    #allocation5 [shape = 'u8[1024]{0}', space=vmem, size = 0x400, scoped, tag = 'input window, operand 1, single buffered']
    #allocation6 [shape = 's32[1]{0}', space=sflag, size = 0x4, scoped, tag = 'scoped memory for tpu_custom_call.1']
    #allocation7 [shape = 'u8[16384]{0}', space=vmem, size = 0x4000, scoped, tag = 'input window, operand 2, single buffered']
    #allocation8 [shape = 'u8[1024]{0}', space=vmem, size = 0x400, scoped, tag = 'output window, operand 0, single buffered']
    %8 = vsyncpa [#allocation3], 0
    %9 = vsyncpa [#allocation6], 0
    %10 = vsyncpa [#allocation4], 0
    // Predicated region
    $region2: #{tpu_custom_call.1} parent=1 // pred_check
      _
    $region3: #{tpu_custom_call.1} parent=1 // pred_check_branch
      %12 = sbr.rel (0) target = $region5
    $region4: #{tpu_custom_call.1} parent=1 // pred_region
      %s14 = ssub.s32 32, 32
      %15 = vsyncadd [#allocation3], %s14
      %s17 = sshll.u32 [#allocation2], 4
      %s18 = int_to_ptr.vmem [resolvable:$true] %s17
      %20 = dma.hbm_to_vmem [thread:$0]  %s0, 32, %s18, [#allocation3]
    $region5: #{tpu_custom_call.1} parent=1 // pred_fallthru
      _
    // Predicated region
    $region6: #{tpu_custom_call.1} parent=1 // pred_check
      _
    $region7: #{tpu_custom_call.1} parent=1 // pred_check_branch
      %22 = sbr.rel (0) target = $region9
    $region8: #{tpu_custom_call.1} parent=1 // pred_region
      %s24 = ssub.s32 32, 32
      %25 = vsyncadd [#allocation6], %s24
      %s27 = sshll.u32 [#allocation5], 4
      %s28 = int_to_ptr.vmem [resolvable:$true] %s27
      %30 = dma.hbm_to_vmem [thread:$0]  %s1, 32, %s28, [#allocation6]
    $region9: #{tpu_custom_call.1} parent=1 // pred_fallthru
      _
    // Predicated region
    $region10: #{tpu_custom_call.1} parent=1 // pred_check
      _
    $region11: #{tpu_custom_call.1} parent=1 // pred_check_branch
      %32 = sbr.rel (0) target = $region13
    $region12: #{tpu_custom_call.1} parent=1 // pred_region
      %s34 = ssub.s32 512, 512
      %35 = vsyncadd [#allocation6], %s34
      %s36 = sshll.u32 [#allocation7], 4
      %s37 = int_to_ptr.vmem [resolvable:$true] %s36
      %42 = dma.hbm_to_vmem [thread:$0]  %s2, 512, %s37, [#allocation6], 128, 128, 8
    $region13: #{tpu_custom_call.1} parent=1 // pred_fallthru
      _
    // Predicated region
    $region14: #{tpu_custom_call.1} parent=1 // pred_check
      _
    $region15: #{tpu_custom_call.1} parent=1 // pred_check_branch
      %44 = sbr.rel (0) target = $region17
    $region16: #{tpu_custom_call.1} parent=1 // pred_region
      %45 = dma.done [#allocation3], 32
    $region17: #{tpu_custom_call.1} parent=1 // pred_fallthru
      _
    // Predicated region
    $region18: #{tpu_custom_call.1} parent=1 // pred_check
      _
    $region19: #{tpu_custom_call.1} parent=1 // pred_check_branch
      %47 = sbr.rel (0) target = $region21
    $region20: #{tpu_custom_call.1} parent=1 // pred_region
      %48 = dma.done [#allocation6], 32
    $region21: #{tpu_custom_call.1} parent=1 // pred_fallthru
      _
    // Predicated region
    $region22: #{tpu_custom_call.1} parent=1 // pred_check
      _
    $region23: #{tpu_custom_call.1} parent=1 // pred_check_branch
      %50 = sbr.rel (0) target = $region25
    $region24: #{tpu_custom_call.1} parent=1 // pred_region
      %51 = dma.done [#allocation6], 512
    $region25: #{tpu_custom_call.1} parent=1 // pred_fallthru
      _
    %v52 = vld [vmem:[#allocation2] sm:$0x3]
    %v53 = vld [vmem:[#allocation5] sm:$0x3]
    %v54 = vld [vmem:[#allocation7] sm:$0x3]
    %v55 = vld [vmem:[#allocation7 + $0x2] sm:$0x3]
    %vm56 = vcmask 15360
    %v58 = vsel %vm56, %v53, 0
    %vm60 = vcmask 1041408
    %v62 = vsel %vm60, %v55, 0
    %64 = vmatprep.subr.mxu0 0.0
    %65 = vmatpush1.msra.mxu0 0.0
    %66 = vmatprep.subr.mxu0 0.0
    %67 = vmatpush1.msra.mxu0 0.0
    %68 = vmatprep.subr.mxu0 0.0
    %69 = vmatpush1.msra.mxu0 0.0
    %70 = vmatprep.subr.mxu0 0.0
    %71 = vmatpush1.msra.mxu0 0.0
    %72 = vmatprep.subr.mxu0 0.0
    %73 = vmatpush1.msra.mxu0 0.0
    %74 = vmatprep.subr.mxu0 0.0
    %75 = vmatpush1.msra.mxu0 0.0
    %76 = vmatprep.subr.mxu0 0.0
    %77 = vmatpush1.msra.mxu0 0.0
    %78 = vmatprep.subr.mxu0 0.0
    %79 = vmatpush1.msra.mxu0 0.0
    %80 = vmatprep.subr.mxu0 0.0
    %81 = vmatpush1.msra.mxu0 0.0
    %82 = vmatprep.subr.mxu0 0.0
    %83 = vmatpush1.msra.mxu0 0.0
    %84 = vmatprep.subr.mxu0 0.0
    %85 = vmatpush1.msra.mxu0 0.0
    %86 = vmatprep.subr.mxu0 0.0
    %87 = vmatpush1.msra.mxu0 0.0
    %88 = vmatprep.subr.mxu0 0.0
    %89 = vmatpush1.msra.mxu0 0.0
    %90 = vmatprep.subr.mxu0 0.0
    %91 = vmatpush1.msra.mxu0 0.0
    %92 = vmatprep.subr.mxu0 0.0
    %93 = vmatpush1.msra.mxu0 0.0
    %94 = vmatprep.subr.mxu0 0.0
    %95 = vmatpush1.msra.mxu0 %v62
    %96 = vmatprep.subr.mxu0 0.0
    %97 = vmatpush2.msra.mxu0 0.0
    %98 = vmatprep.subr.mxu0 0.0
    %99 = vmatpush2.msra.mxu0 0.0
    %100 = vmatprep.subr.mxu0 0.0
    %101 = vmatpush2.msra.mxu0 0.0
    %102 = vmatprep.subr.mxu0 0.0
    %103 = vmatpush2.msra.mxu0 0.0
    %104 = vmatprep.subr.mxu0 0.0
    %105 = vmatpush2.msra.mxu0 0.0
    %106 = vmatprep.subr.mxu0 0.0
    %107 = vmatpush2.msra.mxu0 0.0
    %108 = vmatprep.subr.mxu0 0.0
    %109 = vmatpush2.msra.mxu0 0.0
    %110 = vmatprep.subr.mxu0 0.0
    %111 = vmatpush2.msra.mxu0 0.0
    %112 = vmatprep.subr.mxu0 0.0
    %113 = vmatpush2.msra.mxu0 0.0
    %114 = vmatprep.subr.mxu0 0.0
    %115 = vmatpush2.msra.mxu0 0.0
    %116 = vmatprep.subr.mxu0 0.0
    %117 = vmatpush2.msra.mxu0 0.0
    %118 = vmatprep.subr.mxu0 0.0
    %119 = vmatpush2.msra.mxu0 0.0
    %120 = vmatprep.subr.mxu0 0.0
    %121 = vmatpush2.msra.mxu0 0.0
    %122 = vmatprep.subr.mxu0 0.0
    %123 = vmatpush2.msra.mxu0 0.0
    %124 = vmatprep.subr.mxu0 0.0
    %125 = vmatpush2.msra.mxu0 0.0
    %126 = vmatprep.subr.mxu0 0.0
    %127 = vmatpush2.msra.mxu0 0.0
    %128 = vmatprep.mubr.f32.mxu0 0.0
    %129 = vmatmul.mubr.f32.gmra.mxu0 %v58
    %v130 = vpop.f32.mrf.mxu0
    %v131 = vadd.f32 0.0, %v130
    %v132 = vpop.f32.mrf.mxu0
    %133 = vdwg.mxu0
    %v135 = vsel %vm56, %v52, 0
    %v138 = vsel %vm60, %v54, 0
    %140 = vmatprep.subr.mxu0 0.0
    %141 = vmatpush1.msra.mxu0 0.0
    %142 = vmatprep.subr.mxu0 0.0
    %143 = vmatpush1.msra.mxu0 0.0
    %144 = vmatprep.subr.mxu0 0.0
    %145 = vmatpush1.msra.mxu0 0.0
    %146 = vmatprep.subr.mxu0 0.0
    %147 = vmatpush1.msra.mxu0 0.0
    %148 = vmatprep.subr.mxu0 0.0
    %149 = vmatpush1.msra.mxu0 0.0
    %150 = vmatprep.subr.mxu0 0.0
    %151 = vmatpush1.msra.mxu0 0.0
    %152 = vmatprep.subr.mxu0 0.0
    %153 = vmatpush1.msra.mxu0 0.0
    %154 = vmatprep.subr.mxu0 0.0
    %155 = vmatpush1.msra.mxu0 0.0
    %156 = vmatprep.subr.mxu0 0.0
    %157 = vmatpush1.msra.mxu0 0.0
    %158 = vmatprep.subr.mxu0 0.0
    %159 = vmatpush1.msra.mxu0 0.0
    %160 = vmatprep.subr.mxu0 0.0
    %161 = vmatpush1.msra.mxu0 0.0
    %162 = vmatprep.subr.mxu0 0.0
    %163 = vmatpush1.msra.mxu0 0.0
    %164 = vmatprep.subr.mxu0 0.0
    %165 = vmatpush1.msra.mxu0 0.0
    %166 = vmatprep.subr.mxu0 0.0
    %167 = vmatpush1.msra.mxu0 0.0
    %168 = vmatprep.subr.mxu0 0.0
    %169 = vmatpush1.msra.mxu0 0.0
    %170 = vmatprep.subr.mxu0 0.0
    %171 = vmatpush1.msra.mxu0 %v138
    %172 = vmatprep.subr.mxu0 0.0
    %173 = vmatpush2.msra.mxu0 0.0
    %174 = vmatprep.subr.mxu0 0.0
    %175 = vmatpush2.msra.mxu0 0.0
    %176 = vmatprep.subr.mxu0 0.0
    %177 = vmatpush2.msra.mxu0 0.0
    %178 = vmatprep.subr.mxu0 0.0
    %179 = vmatpush2.msra.mxu0 0.0
    %180 = vmatprep.subr.mxu0 0.0
    %181 = vmatpush2.msra.mxu0 0.0
    %182 = vmatprep.subr.mxu0 0.0
    %183 = vmatpush2.msra.mxu0 0.0
    %184 = vmatprep.subr.mxu0 0.0
    %185 = vmatpush2.msra.mxu0 0.0
    %186 = vmatprep.subr.mxu0 0.0
    %187 = vmatpush2.msra.mxu0 0.0
    %188 = vmatprep.subr.mxu0 0.0
    %189 = vmatpush2.msra.mxu0 0.0
    %190 = vmatprep.subr.mxu0 0.0
    %191 = vmatpush2.msra.mxu0 0.0
    %192 = vmatprep.subr.mxu0 0.0
    %193 = vmatpush2.msra.mxu0 0.0
    %194 = vmatprep.subr.mxu0 0.0
    %195 = vmatpush2.msra.mxu0 0.0
    %196 = vmatprep.subr.mxu0 0.0
    %197 = vmatpush2.msra.mxu0 0.0
    %198 = vmatprep.subr.mxu0 0.0
    %199 = vmatpush2.msra.mxu0 0.0
    %200 = vmatprep.subr.mxu0 0.0
    %201 = vmatpush2.msra.mxu0 0.0
    %202 = vmatprep.subr.mxu0 0.0
    %203 = vmatpush2.msra.mxu0 0.0
    %204 = vmatprep.mubr.f32.mxu0 0.0
    %205 = vmatmul.mubr.f32.gmra.mxu0 %v135
    %v206 = vpop.f32.mrf.mxu0
    %v207 = vadd.f32 %v131, %v206
    %v208 = vpop.f32.mrf.mxu0
    %209 = vdwg.mxu0
    %v210 = vld [vmem:[#allocation7 + $0x4] sm:$0x1]
    %v211 = vlaneseq
    %v212 = vshrl.u32 %v211, 7
    %v213 = vsub.s32 0, %v212
    %v214 = vrot.slane %v210, %v213
    %v215 = vadd.f32 %v207, %v214
    %v216 = vmax.f32 %v215, 0.0
    %218 = vrot.lane.b32.xlu0 %v216, 112
    %v219 = vpop.permute.xlu0 %218
    %v221 = vmul.f32 %v216, %v219
    %v222 = vld [vmem:[#allocation7 + $0x8] sm:$0xff]
    %v223 = vld [vmem:[#allocation7 + $0x10] sm:$0xff]
    %v224 = vld [vmem:[#allocation7 + $0x5] sm:$0x1]
    %v225 = vlaneseq
    %v226 = vshrl.u32 %v225, 7
    %v227 = vsub.s32 0, %v226
    %v228 = vrot.slane %v224, %v227
    %vm229 = vcmask 130048
    %v231 = vsel %vm229, %v221, 0
    %233 = vmatprep.subr.mxu0 0.0
    %234 = vmatpush1.msra.mxu0 0.0
    %235 = vmatprep.subr.mxu0 0.0
    %236 = vmatpush1.msra.mxu0 0.0
    %237 = vmatprep.subr.mxu0 0.0
    %238 = vmatpush1.msra.mxu0 0.0
    %239 = vmatprep.subr.mxu0 0.0
    %240 = vmatpush1.msra.mxu0 0.0
    %241 = vmatprep.subr.mxu0 0.0
    %242 = vmatpush1.msra.mxu0 0.0
    %243 = vmatprep.subr.mxu0 0.0
    %244 = vmatpush1.msra.mxu0 0.0
    %245 = vmatprep.subr.mxu0 0.0
    %246 = vmatpush1.msra.mxu0 0.0
    %247 = vmatprep.subr.mxu0 0.0
    %248 = vmatpush1.msra.mxu0 0.0
    %249 = vmatprep.subr.mxu0 0.0
    %250 = vmatpush1.msra.mxu0 0.0
    %251 = vmatprep.subr.mxu0 0.0
    %252 = vmatpush1.msra.mxu0 0.0
    %253 = vmatprep.subr.mxu0 0.0
    %254 = vmatpush1.msra.mxu0 0.0
    %255 = vmatprep.subr.mxu0 0.0
    %256 = vmatpush1.msra.mxu0 0.0
    %257 = vmatprep.subr.mxu0 0.0
    %258 = vmatpush1.msra.mxu0 0.0
    %259 = vmatprep.subr.mxu0 0.0
    %260 = vmatpush1.msra.mxu0 0.0
    %261 = vmatprep.subr.mxu0 0.0
    %262 = vmatpush1.msra.mxu0 %v223
    %263 = vmatprep.subr.mxu0 0.0
    %264 = vmatpush1.msra.mxu0 %v222
    %265 = vmatprep.subr.mxu0 0.0
    %266 = vmatpush2.msra.mxu0 0.0
    %267 = vmatprep.subr.mxu0 0.0
    %268 = vmatpush2.msra.mxu0 0.0
    %269 = vmatprep.subr.mxu0 0.0
    %270 = vmatpush2.msra.mxu0 0.0
    %271 = vmatprep.subr.mxu0 0.0
    %272 = vmatpush2.msra.mxu0 0.0
    %273 = vmatprep.subr.mxu0 0.0
    %274 = vmatpush2.msra.mxu0 0.0
    %275 = vmatprep.subr.mxu0 0.0
    %276 = vmatpush2.msra.mxu0 0.0
    %277 = vmatprep.subr.mxu0 0.0
    %278 = vmatpush2.msra.mxu0 0.0
    %279 = vmatprep.subr.mxu0 0.0
    %280 = vmatpush2.msra.mxu0 0.0
    %281 = vmatprep.subr.mxu0 0.0
    %282 = vmatpush2.msra.mxu0 0.0
    %283 = vmatprep.subr.mxu0 0.0
    %284 = vmatpush2.msra.mxu0 0.0
    %285 = vmatprep.subr.mxu0 0.0
    %286 = vmatpush2.msra.mxu0 0.0
    %287 = vmatprep.subr.mxu0 0.0
    %288 = vmatpush2.msra.mxu0 0.0
    %289 = vmatprep.subr.mxu0 0.0
    %290 = vmatpush2.msra.mxu0 0.0
    %291 = vmatprep.subr.mxu0 0.0
    %292 = vmatpush2.msra.mxu0 0.0
    %293 = vmatprep.subr.mxu0 0.0
    %294 = vmatpush2.msra.mxu0 0.0
    %295 = vmatprep.subr.mxu0 0.0
    %296 = vmatpush2.msra.mxu0 0.0
    %297 = vmatprep.mubr.f32.mxu0 0.0
    %298 = vmatmul.mubr.f32.gmra.mxu0 %v231
    %v299 = vpop.f32.mrf.mxu0
    %v300 = vadd.f32 %v228, %v299
    %v301 = vpop.f32.mrf.mxu0
    %302 = vdwg.mxu0
    %v303 = vmax.f32 %v300, 0.0
    %v304 = vld [vmem:[#allocation7 + $0x18] sm:$0x3]
    %v305 = vld [vmem:[#allocation7 + $0x6] sm:$0x1]
    %v306 = vlaneseq
    %v307 = vshrl.u32 %v306, 7
    %v308 = vsub.s32 0, %v307
    %v309 = vrot.slane %v305, %v308
    %vm310 = vcmask 261120
    %v312 = vsel %vm310, %v303, 0
    %v315 = vsel %vm310, %v304, 0
    %317 = vmatprep.subr.mxu0 0.0
    %318 = vmatpush1.xpose.msra.mxu0 0.0
    %319 = vmatprep.subr.mxu0 0.0
    %320 = vmatpush1.xpose.msra.mxu0 0.0
    %321 = vmatprep.subr.mxu0 0.0
    %322 = vmatpush1.xpose.msra.mxu0 0.0
    %323 = vmatprep.subr.mxu0 0.0
    %324 = vmatpush1.xpose.msra.mxu0 0.0
    %325 = vmatprep.subr.mxu0 0.0
    %326 = vmatpush1.xpose.msra.mxu0 0.0
    %327 = vmatprep.subr.mxu0 0.0
    %328 = vmatpush1.xpose.msra.mxu0 0.0
    %329 = vmatprep.subr.mxu0 0.0
    %330 = vmatpush1.xpose.msra.mxu0 0.0
    %331 = vmatprep.subr.mxu0 0.0
    %332 = vmatpush1.xpose.msra.mxu0 0.0
    %333 = vmatprep.subr.mxu0 0.0
    %334 = vmatpush1.xpose.msra.mxu0 0.0
    %335 = vmatprep.subr.mxu0 0.0
    %336 = vmatpush1.xpose.msra.mxu0 0.0
    %337 = vmatprep.subr.mxu0 0.0
    %338 = vmatpush1.xpose.msra.mxu0 0.0
    %339 = vmatprep.subr.mxu0 0.0
    %340 = vmatpush1.xpose.msra.mxu0 0.0
    %341 = vmatprep.subr.mxu0 0.0
    %342 = vmatpush1.xpose.msra.mxu0 0.0
    %343 = vmatprep.subr.mxu0 0.0
    %344 = vmatpush1.xpose.msra.mxu0 0.0
    %345 = vmatprep.subr.mxu0 0.0
    %346 = vmatpush1.xpose.msra.mxu0 0.0
    %347 = vmatprep.subr.mxu0 0.0
    %348 = vmatpush1.xpose.msra.mxu0 %v315
    %349 = vmatprep.subr.mxu0 0.0
    %350 = vmatpush2.xpose.msra.mxu0 0.0
    %351 = vmatprep.subr.mxu0 0.0
    %352 = vmatpush2.xpose.msra.mxu0 0.0
    %353 = vmatprep.subr.mxu0 0.0
    %354 = vmatpush2.xpose.msra.mxu0 0.0
    %355 = vmatprep.subr.mxu0 0.0
    %356 = vmatpush2.xpose.msra.mxu0 0.0
    %357 = vmatprep.subr.mxu0 0.0
    %358 = vmatpush2.xpose.msra.mxu0 0.0
    %359 = vmatprep.subr.mxu0 0.0
    %360 = vmatpush2.xpose.msra.mxu0 0.0
    %361 = vmatprep.subr.mxu0 0.0
    %362 = vmatpush2.xpose.msra.mxu0 0.0
    %363 = vmatprep.subr.mxu0 0.0
    %364 = vmatpush2.xpose.msra.mxu0 0.0
    %365 = vmatprep.subr.mxu0 0.0
    %366 = vmatpush2.xpose.msra.mxu0 0.0
    %367 = vmatprep.subr.mxu0 0.0
    %368 = vmatpush2.xpose.msra.mxu0 0.0
    %369 = vmatprep.subr.mxu0 0.0
    %370 = vmatpush2.xpose.msra.mxu0 0.0
    %371 = vmatprep.subr.mxu0 0.0
    %372 = vmatpush2.xpose.msra.mxu0 0.0
    %373 = vmatprep.subr.mxu0 0.0
    %374 = vmatpush2.xpose.msra.mxu0 0.0
    %375 = vmatprep.subr.mxu0 0.0
    %376 = vmatpush2.xpose.msra.mxu0 0.0
    %377 = vmatprep.subr.mxu0 0.0
    %378 = vmatpush2.xpose.msra.mxu0 0.0
    %379 = vmatprep.subr.mxu0 0.0
    %380 = vmatpush2.xpose.msra.mxu0 0.0
    %381 = vmatprep.mubr.f32.mxu0 0.0
    %382 = vmatmul.mubr.f32.gmra.mxu0 %v312
    %v383 = vpop.f32.mrf.mxu0
    %v384 = vadd.f32 %v309, %v383
    %v385 = vpop.f32.mrf.mxu0
    %386 = vdwg.mxu0
    %v387 = vtanh.pop %v384
    %vm388 = vcmask 9216
    %389 = vst.msk [vmem:[#allocation8] sm:$0x3] %vm388, %v387
    // Predicated region
    $region26: #{tpu_custom_call.1} parent=1 // pred_check
      _
    $region27: #{tpu_custom_call.1} parent=1 // pred_check_branch
      %391 = sbr.rel (0) target = $region29
    $region28: #{tpu_custom_call.1} parent=1 // pred_region
      %s393 = ssub.s32 32, 32
      %394 = vsyncadd [#allocation4], %s393
      %s396 = sshll.u32 [#allocation8], 4
      %s397 = int_to_ptr.vmem [resolvable:$true] %s396
      %399 = dma.vmem_to_hbm [thread:$0]  %s397, 32, %s3, [#allocation4]
    $region29: #{tpu_custom_call.1} parent=1 // pred_fallthru
      _
    // Predicated region
    $region30: #{tpu_custom_call.1} parent=1 // pred_check
      _
    $region31: #{tpu_custom_call.1} parent=1 // pred_check_branch
      %401 = sbr.rel (0) target = $region33
    $region32: #{tpu_custom_call.1} parent=1 // pred_region
      %402 = dma.done [#allocation4], 32
    $region33: #{tpu_custom_call.1} parent=1 // pred_fallthru
      _
    %403 = vsyncpa [#allocation3], 1
    %404 = vsyncpa [#allocation6], 1
    %405 = vsyncpa [#allocation4], 1

</llo_original>
